<compile_context>
chip_gen: v7x
topology: tpu7x:2x2x1
jax: 0.10.0
libtpu: 0.0.40
codegen_flags: <defaults>
</compile_context>

<pallas_src>
import math

import jax
import jax.numpy as jnp
from jax.experimental import pallas as pl
from jax.experimental.pallas import tpu as pltpu

_SQRT_2_OVER_PI = math.sqrt(2.0 / math.pi)


def _gelu_new(x):
    # GPT-2 "gelu_new": 0.5*x*(1 + tanh(sqrt(2/pi)*(x + 0.044715*x^3)))
    # x*x*x keeps the cube on the VPU; the EUP slot is reserved for tanh.
    x3 = x * x * x
    return 0.5 * x * (1.0 + jnp.tanh(_SQRT_2_OVER_PI * (x + 0.044715 * x3)))


def _mlp_kernel_accum_out(x_ref, w_in_ref, b_in_ref, w_out_ref, b_out_ref, o_ref):
    """f32 output tile is VMEM-resident across k: accumulate directly into it."""
    k = pl.program_id(1)

    @pl.when(k == 0)
    def _init():
        # Fold b_out into the init instead of a finalize add.
        o_ref[...] = jnp.broadcast_to(b_out_ref[...].astype(jnp.float32),
                                      o_ref.shape)

    h = jnp.dot(x_ref[...], w_in_ref[...], preferred_element_type=jnp.float32)
    h = h + b_in_ref[...].astype(jnp.float32)               # (tm, tk) f32
    g = _gelu_new(h)                                         # f32 VPU/EUP
    o_ref[...] += jnp.dot(g.astype(w_out_ref.dtype), w_out_ref[...],
                          preferred_element_type=jnp.float32)


def _mlp_kernel_scratch(x_ref, w_in_ref, b_in_ref, w_out_ref, b_out_ref,
                        o_ref, acc_ref):
    """Non-f32 output: accumulate in an f32 VMEM scratch, cast on finalize."""
    k = pl.program_id(1)

    @pl.when(k == 0)
    def _init():
        acc_ref[...] = jnp.broadcast_to(b_out_ref[...].astype(jnp.float32),
                                        acc_ref.shape)

    h = jnp.dot(x_ref[...], w_in_ref[...], preferred_element_type=jnp.float32)
    h = h + b_in_ref[...].astype(jnp.float32)
    g = _gelu_new(h)
    acc_ref[...] += jnp.dot(g.astype(w_out_ref.dtype), w_out_ref[...],
                            preferred_element_type=jnp.float32)

    @pl.when(k == pl.num_programs(1) - 1)
    def _finalize():
        o_ref[...] = acc_ref[...].astype(o_ref.dtype)


def _round_up(n, m):
    return ((n + m - 1) // m) * m


def _vmem_capacity_bytes():
    try:
        info = pltpu.get_tpu_info()
        for attr in ("vmem_capacity_bytes", "vmem_bytes", "vmem_size_bytes"):
            v = getattr(info, attr, None)
            if v:
                return int(v)
    except Exception:
        pass
    return 64 * 1024 * 1024  # conservative (v7x-sized) fallback


def _pick_tk(d_mlp, target):
    """Largest divisor of d_mlp <= target that is a multiple of 128 (or d_mlp
    itself if small). Avoids per-call jnp.pad copies of the weight matrices."""
    if d_mlp <= target:
        return d_mlp, d_mlp
    for cand in range(target, 127, -128):
        if d_mlp % cand == 0:
            return cand, d_mlp
    # No friendly divisor: fall back to padding the K axis.
    tk = max(128, (target // 128) * 128)
    return tk, _round_up(d_mlp, tk)


def mlp_forward(x, W_in, b_in, W_out, b_out, *, tm=None, tk=None,
                compute_dtype=jnp.bfloat16):
    """x: [batch, posn, d_model] -> [batch, posn, d_model]."""
    batch, posn, d_model = x.shape
    d_mlp = W_in.shape[1]
    out_dtype = x.dtype

    if compute_dtype is not None:
        # bf16 operands (MXU-native); accumulation stays f32 in-kernel.
        x = x.astype(compute_dtype)
        W_in = W_in.astype(compute_dtype)
        W_out = W_out.astype(compute_dtype)

    cbytes = jnp.dtype(x.dtype).itemsize
    out_bytes = jnp.dtype(out_dtype).itemsize

    M = batch * posn
    x2 = x.reshape(M, d_model)

    vmem_bytes = _vmem_capacity_bytes()
    small_vmem = vmem_bytes <= 64 * 1024 * 1024   # v7x-like: 64 MiB VMEM, 2 TCs

    tm_target = tm if tm is not None else (512 if small_vmem else 768)
    tk_target = tk if tk is not None else (512 if small_vmem else 1024)

    tk, K_pad = _pick_tk(d_mlp, tk_target)

    # Row tile: large for the weight-streaming roofline, multiple of 8.
    tm = min(tm_target, _round_up(M, 8))
    tm = max(8, (tm // 8) * 8)
    # v7x-like: prefer >=2 row tiles so the "parallel" axis uses both cores.
    if small_vmem and tm >= M and M >= 512:
        tm = max(256, _round_up((M + 1) // 2, 8))

    def footprint(tm_, tk_):
        f = 2 * tm_ * d_model * cbytes              # x tile (double-buffered)
        f += 2 * d_model * tk_ * cbytes             # W_in K-slice
        f += 2 * tk_ * d_model * cbytes             # W_out K-slice
        f += 2 * (tk_ + d_model) * 4                # biases
        f += 2 * tm_ * d_model * out_bytes          # output tile
        f += tm_ * d_model * 4                      # f32 accumulator (worst case)
        f += 3 * tm_ * tk_ * 4                      # h / g / GELU f32 temporaries
        return f

    budget = int(0.75 * vmem_bytes)
    while tm > 8 and footprint(tm, tk) > budget:
        tm = max(8, (tm // 2 // 8) * 8)

    M_pad = _round_up(M, tm)
    if M_pad != M:
        x2 = jnp.pad(x2, ((0, M_pad - M), (0, 0)))

    if K_pad != d_mlp:
        # Only reached when d_mlp has no 128-multiple divisor <= tk_target.
        # Zero-padded K slices contribute exactly zero to the accumulator.
        W_in = jnp.pad(W_in, ((0, 0), (0, K_pad - d_mlp)))
        b_in = jnp.pad(b_in, ((0, K_pad - d_mlp),))
        W_out = jnp.pad(W_out, ((0, K_pad - d_mlp), (0, 0)))

    b_in2 = b_in.reshape(1, K_pad)
    b_out2 = b_out.reshape(1, d_model)

    grid = (M_pad // tm, K_pad // tk)
    n_row_tiles = grid[0]

    vmem_limit = min(int(0.9 * vmem_bytes),
                     max(int(1.25 * footprint(tm, tk)), 32 * 1024 * 1024))

    cost = pl.CostEstimate(
        flops=int(4 * M_pad * d_model * K_pad),          # two matmuls
        transcendentals=int(M_pad * K_pad),              # one tanh per hidden elem
        bytes_accessed=int(
            x2.size * cbytes
            # W_in / W_out / b_in are re-streamed once per row tile.
            + n_row_tiles * (W_in.size * cbytes + W_out.size * cbytes
                             + b_in2.size * jnp.dtype(b_in2.dtype).itemsize)
            + b_out2.size * jnp.dtype(b_out2.dtype).itemsize
            + M_pad * d_model * out_bytes),
    )

    direct_acc = jnp.dtype(out_dtype) == jnp.dtype(jnp.float32)
    kernel = _mlp_kernel_accum_out if direct_acc else _mlp_kernel_scratch
    scratch_shapes = ([] if direct_acc
                      else [pltpu.VMEM((tm, d_model), jnp.float32)])

    out2 = pl.pallas_call(
        kernel,
        out_shape=jax.ShapeDtypeStruct((M_pad, d_model), out_dtype),
        grid_spec=pltpu.PrefetchScalarGridSpec(
            num_scalar_prefetch=0,
            grid=grid,
            in_specs=[
                pl.BlockSpec((tm, d_model), lambda i, k: (i, 0)),   # x row tile
                pl.BlockSpec((d_model, tk), lambda i, k: (0, k)),   # W_in K-slice
                pl.BlockSpec((1, tk), lambda i, k: (0, k)),         # b_in K-slice
                pl.BlockSpec((tk, d_model), lambda i, k: (k, 0)),   # W_out K-slice
                pl.BlockSpec((1, d_model), lambda i, k: (0, 0)),    # b_out
            ],
            out_specs=pl.BlockSpec((tm, d_model), lambda i, k: (i, 0)),
            scratch_shapes=scratch_shapes,
        ),
        compiler_params=pltpu.CompilerParams(
            dimension_semantics=("parallel", "arbitrary"),
            vmem_limit_bytes=int(vmem_limit),
        ),
        cost_estimate=cost,
    )(x2, W_in, b_in2, W_out, b_out2)

    if M_pad != M:
        out2 = out2[:M]
    return out2.reshape(batch, posn, d_model)


def mlp_reference(x, W_in, b_in, W_out, b_out):
    h = jnp.einsum("bse,eh->bsh", x, W_in) + b_in
    g = _gelu_new(h)
    return jnp.einsum("bsh,he->bse", g, W_out) + b_out


if __name__ == "__main__":
    # Small, cfg-consistent shapes: batch=2, posn=8, d_model=128, d_mlp=512.
    batch, posn, d_model, d_mlp = 2, 8, 128, 512
    init_range = 0.02

    key = jax.random.PRNGKey(0)
    k_x, k_win, k_wout = jax.random.split(key, 3)

    x = jax.random.normal(k_x, (batch, posn, d_model), dtype=jnp.float32)
    W_in = init_range * jax.random.normal(k_win, (d_model, d_mlp), dtype=jnp.float32)
    W_out = init_range * jax.random.normal(k_wout, (d_mlp, d_model), dtype=jnp.float32)
    b_in = jnp.zeros((d_mlp,), dtype=jnp.float32)
    b_out = jnp.zeros((d_model,), dtype=jnp.float32)

    ref = mlp_reference(x, W_in, b_in, W_out, b_out)

    # 1) Default path: bf16 operands on the MXU, f32 accumulation, f32 output.
    out = jax.block_until_ready(mlp_forward(x, W_in, b_in, W_out, b_out))
    assert out.shape == (batch, posn, d_model)
    assert jnp.allclose(out, ref, atol=1e-2, rtol=2e-2), "bf16-compute path mismatch"

    # 2) Full-f32 path: matches the reference at tight tolerance.
    out_f32 = jax.block_until_ready(
        mlp_forward(x, W_in, b_in, W_out, b_out, compute_dtype=None))
    assert jnp.allclose(out_f32, ref, atol=1e-5, rtol=1e-5), "f32 path mismatch"

    # 3) Non-divisible token count: exercises M padding + slice-off.
    x_odd = x[:, :7, :]
    out_odd = jax.block_until_ready(mlp_forward(x_odd, W_in, b_in, W_out, b_out))
    ref_odd = mlp_reference(x_odd, W_in, b_in, W_out, b_out)
    assert out_odd.shape == (batch, 7, d_model)
    assert jnp.allclose(out_odd, ref_odd, atol=1e-2, rtol=2e-2)

    # 4) bf16 input/output: exercises the f32-scratch + finalize-cast kernel.
    x_bf16 = x.astype(jnp.bfloat16)
    out_bf16 = jax.block_until_ready(mlp_forward(x_bf16, W_in, b_in, W_out, b_out))
    assert out_bf16.dtype == jnp.bfloat16
    assert jnp.allclose(out_bf16.astype(jnp.float32), ref, atol=2e-2, rtol=5e-2)

    print("KERNEL_OK")
</pallas_src>

<mosaic_0001>
module attributes {stable_mosaic.version = 11 : i64} {
  func.func @_mlp_kernel_accum_out(%arg0: i32, %arg1: i32, %arg2: memref<16x128xbf16, #tpu.memory_space<vmem>>, %arg3: memref<128x512xbf16, #tpu.memory_space<vmem>>, %arg4: memref<1x512xf32, #tpu.memory_space<vmem>>, %arg5: memref<512x128xbf16, #tpu.memory_space<vmem>>, %arg6: memref<1x128xf32, #tpu.memory_space<vmem>>, %arg7: memref<16x128xf32, #tpu.memory_space<vmem>>) attributes {dimension_semantics = [#tpu.dimension_semantics<parallel>, #tpu.dimension_semantics<arbitrary>], iteration_bounds = array<i64: 1, 1>, scalar_prefetch = 0 : i64, scratch_operands = 0 : i64, tpu.core_type = #tpu.core_type<tc>, window_params = [{transform_indices = @transform_0, window_bounds = array<i64: 16, 128>}, {transform_indices = @transform_1, window_bounds = array<i64: 128, 512>}, {transform_indices = @transform_2, window_bounds = array<i64: 1, 512>}, {transform_indices = @transform_3, window_bounds = array<i64: 512, 128>}, {pipeline_mode = #tpu.pipeline_mode<synchronous>, transform_indices = @transform_4, window_bounds = array<i64: 1, 128>}, {transform_indices = @transform_5, window_bounds = array<i64: 16, 128>}]} {
    %c0_i32 = arith.constant 0 : i32
    %0 = arith.cmpi eq, %arg1, %c0_i32 : i32
    %1 = arith.extui %0 : i1 to i32
    %c0_i32_0 = arith.constant 0 : i32
    %2 = arith.cmpi ne, %1, %c0_i32_0 : i32
    scf.if %2 {
      %c0_17 = arith.constant 0 : index
      %c0_18 = arith.constant 0 : index
      %28 = vector.load %arg6[%c0_17, %c0_18] : memref<1x128xf32, #tpu.memory_space<vmem>>, vector<1x128xf32>
      %29 = vector.shape_cast %28 : vector<1x128xf32> to vector<1x128xf32>
      %30 = vector.broadcast %29 : vector<1x128xf32> to vector<16x128xf32>
      %c0_19 = arith.constant 0 : index
      %c0_20 = arith.constant 0 : index
      %31 = vector.load %arg7[%c0_19, %c0_20] : memref<16x128xf32, #tpu.memory_space<vmem>>, vector<16x128xf32>
      tpu.vector_store %arg7[%c0_19, %c0_20], %30 {strides = array<i32>} : memref<16x128xf32, #tpu.memory_space<vmem>>, vector<16x128xf32>,
    } else {
    }
    %c0 = arith.constant 0 : index
    %c0_1 = arith.constant 0 : index
    %3 = vector.load %arg2[%c0, %c0_1] : memref<16x128xbf16, #tpu.memory_space<vmem>>, vector<16x128xbf16>
    %c0_2 = arith.constant 0 : index
    %c0_3 = arith.constant 0 : index
    %4 = vector.load %arg3[%c0_2, %c0_3] : memref<128x512xbf16, #tpu.memory_space<vmem>>, vector<128x512xbf16>
    %cst = arith.constant dense<0.000000e+00> : vector<16x512xf32>
    %5 = tpu.matmul %3, %4, %cst {dimension_numbers = #tpu.dot_dimension_numbers<[1], [0], [0], [1], [0, 0, 1, 1], [], []>} : vector<16x128xbf16>, vector<128x512xbf16>, vector<16x512xf32> -> vector<16x512xf32>
    %c0_4 = arith.constant 0 : index
    %c0_5 = arith.constant 0 : index
    %6 = vector.load %arg4[%c0_4, %c0_5] : memref<1x512xf32, #tpu.memory_space<vmem>>, vector<1x512xf32>
    %7 = vector.broadcast %6 : vector<1x512xf32> to vector<16x512xf32>
    %8 = arith.addf %5, %7 : vector<16x512xf32>
    %9 = arith.mulf %8, %8 : vector<16x512xf32>
    %10 = arith.mulf %9, %8 : vector<16x512xf32>
    %cst_6 = arith.constant 5.000000e-01 : f32
    %11 = vector.broadcast %cst_6 : f32 to vector<16x512xf32>
    %12 = arith.mulf %11, %8 : vector<16x512xf32>
    %cst_7 = arith.constant 4.471500e-02 : f32
    %13 = vector.broadcast %cst_7 : f32 to vector<16x512xf32>
    %14 = arith.mulf %13, %10 : vector<16x512xf32>
    %15 = arith.addf %8, %14 : vector<16x512xf32>
    %cst_8 = arith.constant 0.797884583 : f32
    %16 = vector.broadcast %cst_8 : f32 to vector<16x512xf32>
    %17 = arith.mulf %16, %15 : vector<16x512xf32>
    %18 = math.tanh %17 : vector<16x512xf32>
    %cst_9 = arith.constant 1.000000e+00 : f32
    %19 = vector.broadcast %cst_9 : f32 to vector<16x512xf32>
    %20 = arith.addf %19, %18 : vector<16x512xf32>
    %21 = arith.mulf %12, %20 : vector<16x512xf32>
    %c0_10 = arith.constant 0 : index
    %c0_11 = arith.constant 0 : index
    %22 = vector.load %arg7[%c0_10, %c0_11] : memref<16x128xf32, #tpu.memory_space<vmem>>, vector<16x128xf32>
    %23 = arith.truncf %21 : vector<16x512xf32> to vector<16x512xbf16>
    %c0_12 = arith.constant 0 : index
    %c0_13 = arith.constant 0 : index
    %24 = vector.load %arg5[%c0_12, %c0_13] : memref<512x128xbf16, #tpu.memory_space<vmem>>, vector<512x128xbf16>
    %cst_14 = arith.constant dense<0.000000e+00> : vector<16x128xf32>
    %25 = tpu.matmul %23, %24, %cst_14 {dimension_numbers = #tpu.dot_dimension_numbers<[1], [0], [0], [1], [0, 0, 1, 1], [], []>} : vector<16x512xbf16>, vector<512x128xbf16>, vector<16x128xf32> -> vector<16x128xf32>
    %26 = arith.addf %22, %25 : vector<16x128xf32>
    %c0_15 = arith.constant 0 : index
    %c0_16 = arith.constant 0 : index
    %27 = vector.load %arg7[%c0_15, %c0_16] : memref<16x128xf32, #tpu.memory_space<vmem>>, vector<16x128xf32>
    tpu.vector_store %arg7[%c0_15, %c0_16], %26 {strides = array<i32>} : memref<16x128xf32, #tpu.memory_space<vmem>>, vector<16x128xf32>,
    return
  }
  func.func @transform_0(%arg0: i32, %arg1: i32) -> (i32, i32) {
    %c0_i32 = arith.constant 0 : i32
    %c0_i32_0 = arith.constant 0 : i32
    return %arg0, %c0_i32 : i32, i32
  }
  func.func @transform_1(%arg0: i32, %arg1: i32) -> (i32, i32) {
    %c0_i32 = arith.constant 0 : i32
    %c0_i32_0 = arith.constant 0 : i32
    return %c0_i32, %arg1 : i32, i32
  }
  func.func @transform_2(%arg0: i32, %arg1: i32) -> (i32, i32) {
    %c0_i32 = arith.constant 0 : i32
    %c0_i32_0 = arith.constant 0 : i32
    return %c0_i32, %arg1 : i32, i32
  }
  func.func @transform_3(%arg0: i32, %arg1: i32) -> (i32, i32) {
    %c0_i32 = arith.constant 0 : i32
    %c0_i32_0 = arith.constant 0 : i32
    return %arg1, %c0_i32 : i32, i32
  }
  func.func @transform_4(%arg0: i32, %arg1: i32) -> (i32, i32) {
    %c0_i32 = arith.constant 0 : i32
    %c0_i32_0 = arith.constant 0 : i32
    %c0_i32_1 = arith.constant 0 : i32
    return %c0_i32, %c0_i32_0 : i32, i32
  }
  func.func @transform_5(%arg0: i32, %arg1: i32) -> (i32, i32) {
    %c0_i32 = arith.constant 0 : i32
    %c0_i32_0 = arith.constant 0 : i32
    return %arg0, %c0_i32 : i32, i32
  }
}

</mosaic_0001>

<llo_original>
// kernel: tpu_custom_call.1
$region0: #{tpu_custom_call.1}
  #allocation0 [shape = 'u32[]', space=smem, size = 0x4, offset = 0x4, fixed_abs, tag = 'smem constant byte address 0x4 - core index']
  #allocation1 [shape = 'u32[144,128]{1,0:T(1,128)}', space=vmem, size = 0x12000, scoped, tag = 'internal scratch']
  %s0 = inlined_call_operand.hbm [shape: bf16[16,128], index: 0, kind: input, shape index: {}]
  %s1 = inlined_call_operand.hbm [shape: bf16[128,512], index: 1, kind: input, shape index: {}]
  %s2 = inlined_call_operand.vmem [shape: f32[1,512], index: 2, kind: input, shape index: {}]
  %s3 = inlined_call_operand.hbm [shape: bf16[512,128], index: 3, kind: input, shape index: {}]
  %s4 = inlined_call_operand.vmem [shape: f32[1,128], index: 4, kind: input, shape index: {}]
  %s5 = inlined_call_operand.hbm [shape: f32[16,128], index: 5, kind: output, shape index: {}]
  %s6 = sld [smem:[#allocation0]]
  $region46: #{tpu_custom_call.1} parent=0
    _
  %s8 = ssub.s32 1, %s6
  %s9 = scalar_select 0, %s8, %s6
  $region1: #{tpu_custom_call.1} parent=0
    #allocation2 [shape = 'u8[4096]{0}', space=vmem, size = 0x1000, scoped, tag = 'input window, operand 0, single buffered']
    #allocation3 [shape = 's32[1]{0}', space=sflag, size = 0x4, scoped, tag = 'scoped memory for tpu_custom_call.1']
    #allocation4 [shape = 's32[1]{0}', space=sflag, size = 0x4, scoped, tag = 'scoped memory for tpu_custom_call.1']
    #allocation5 [shape = 'u8[131072]{0}', space=vmem, size = 0x20000, scoped, tag = 'input window, operand 1, single buffered']
    #allocation6 [shape = 's32[1]{0}', space=sflag, size = 0x4, scoped, tag = 'scoped memory for tpu_custom_call.1']
    #allocation7 [shape = 'u8[131072]{0}', space=vmem, size = 0x20000, scoped, tag = 'input window, operand 3, single buffered']
    #allocation8 [shape = 'u8[8192]{0}', space=vmem, size = 0x2000, scoped, tag = 'output window, operand 0, single buffered']
    %10 = vsyncpa [#allocation3], 0
    %11 = vsyncpa [#allocation6], 0
    %12 = vsyncpa [#allocation4], 0
    // Predicated region
    $region2: #{tpu_custom_call.1} parent=1 // pred_check
      _
    $region3: #{tpu_custom_call.1} parent=1 // pred_check_branch
      %14 = sbr.rel (0) target = $region5
    $region4: #{tpu_custom_call.1} parent=1 // pred_region
      %s16 = ssub.s32 128, 128
      %17 = vsyncadd [#allocation3], %s16
      %s18 = sshll.u32 [#allocation2], 4
      %s19 = int_to_ptr.vmem [resolvable:$true] %s18
      %24 = dma.hbm_to_vmem [thread:$0]  %s0, 128, %s19, [#allocation3], 64, 64, 4
    $region5: #{tpu_custom_call.1} parent=1 // pred_fallthru
      _
    // Predicated region
    $region6: #{tpu_custom_call.1} parent=1 // pred_check
      _
    $region7: #{tpu_custom_call.1} parent=1 // pred_check_branch
      %26 = sbr.rel (0) target = $region9
    $region8: #{tpu_custom_call.1} parent=1 // pred_region
      %s28 = ssub.s32 4096, 4096
      %29 = vsyncadd [#allocation6], %s28
      %s30 = sshll.u32 [#allocation5], 4
      %s31 = int_to_ptr.vmem [resolvable:$true] %s30
      %36 = dma.hbm_to_vmem [thread:$0]  %s1, 4096, %s31, [#allocation6], 256, 256, 16
    $region9: #{tpu_custom_call.1} parent=1 // pred_fallthru
      _
    // Predicated region
    $region10: #{tpu_custom_call.1} parent=1 // pred_check
      _
    $region11: #{tpu_custom_call.1} parent=1 // pred_check_branch
      %38 = sbr.rel (0) target = $region13
    $region12: #{tpu_custom_call.1} parent=1 // pred_region
      _
    $region13: #{tpu_custom_call.1} parent=1 // pred_fallthru
      _
    // Predicated region
    $region14: #{tpu_custom_call.1} parent=1 // pred_check
      _
    $region15: #{tpu_custom_call.1} parent=1 // pred_check_branch
      %40 = sbr.rel (0) target = $region17
    $region16: #{tpu_custom_call.1} parent=1 // pred_region
      %s42 = ssub.s32 4096, 4096
      %43 = vsyncadd [#allocation6], %s42
      %s44 = sshll.u32 [#allocation7], 4
      %s45 = int_to_ptr.vmem [resolvable:$true] %s44
      %50 = dma.hbm_to_vmem [thread:$0]  %s3, 4096, %s45, [#allocation6], 64, 64, 4
    $region17: #{tpu_custom_call.1} parent=1 // pred_fallthru
      _
    // Predicated region
    $region18: #{tpu_custom_call.1} parent=1 // pred_check
      _
    $region19: #{tpu_custom_call.1} parent=1 // pred_check_branch
      %52 = sbr.rel (0) target = $region21
    $region20: #{tpu_custom_call.1} parent=1 // pred_region
      _
    $region21: #{tpu_custom_call.1} parent=1 // pred_fallthru
      _
    // Predicated region
    $region22: #{tpu_custom_call.1} parent=1 // pred_check
      _
    $region23: #{tpu_custom_call.1} parent=1 // pred_check_branch
      %54 = sbr.rel (0) target = $region25
    $region24: #{tpu_custom_call.1} parent=1 // pred_region
      %55 = dma.done [#allocation3], 128
    $region25: #{tpu_custom_call.1} parent=1 // pred_fallthru
      _
    // Predicated region
    $region26: #{tpu_custom_call.1} parent=1 // pred_check
      _
    $region27: #{tpu_custom_call.1} parent=1 // pred_check_branch
      %57 = sbr.rel (0) target = $region29
    $region28: #{tpu_custom_call.1} parent=1 // pred_region
      %58 = dma.done [#allocation6], 4096
    $region29: #{tpu_custom_call.1} parent=1 // pred_fallthru
      _
    // Predicated region
    $region30: #{tpu_custom_call.1} parent=1 // pred_check
      _
    $region31: #{tpu_custom_call.1} parent=1 // pred_check_branch
      %60 = sbr.rel (0) target = $region33
    $region32: #{tpu_custom_call.1} parent=1 // pred_region
      %61 = dma.done [#allocation6], 4096
    $region33: #{tpu_custom_call.1} parent=1 // pred_fallthru
      _
    %p63 = scmp.eq.s32.totalorder 0, 0
    // Predicated region
    $region34: #{tpu_custom_call.1} parent=1 // pred_check
      %p64 = pneg %p63
    $region35: #{tpu_custom_call.1} parent=1 // pred_check_branch
      %66 = sbr.rel (%p64) target = $region37
    $region36: #{tpu_custom_call.1} parent=1 // pred_region
      %v67 = vld [vmem:[%s4] sm:$0x1]
      %v69 = vlaneseq
      %v70 = vshrl.u32 %v69, 7
      %v71 = vsub.s32 0, %v70
      %v72 = vrot.slane %v67, %v71
      %74 = vst [vmem:[#allocation8] sm:$0xff] %v72
      %75 = vst [vmem:[#allocation8 + $0x8] sm:$0xff] %v72
    $region37: #{tpu_custom_call.1} parent=1 // pred_fallthru
      _
    %v76 = vld [vmem:[#allocation2] sm:$0xf]
    %v77 = vld [vmem:[#allocation2 + $0x4] sm:$0xf]
    %v78 = vld [vmem:[#allocation5] sm:$0xff]
    %v79 = vld [vmem:[#allocation5 + $0x8] sm:$0xff]
    %v80 = vld [vmem:[#allocation5 + $0x10] sm:$0xff]
    %v81 = vld [vmem:[#allocation5 + $0x18] sm:$0xff]
    %v82 = vld [vmem:[#allocation5 + $0x20] sm:$0xff]
    %v83 = vld [vmem:[#allocation5 + $0x28] sm:$0xff]
    %v84 = vld [vmem:[#allocation5 + $0x30] sm:$0xff]
    %v85 = vld [vmem:[#allocation5 + $0x38] sm:$0xff]
    %v86 = vld [vmem:[#allocation5 + $0x40] sm:$0xff]
    %v87 = vld [vmem:[#allocation5 + $0x48] sm:$0xff]
    %v88 = vld [vmem:[#allocation5 + $0x50] sm:$0xff]
    %v89 = vld [vmem:[#allocation5 + $0x58] sm:$0xff]
    %v90 = vld [vmem:[#allocation5 + $0x60] sm:$0xff]
    %v91 = vld [vmem:[#allocation5 + $0x68] sm:$0xff]
    %v92 = vld [vmem:[#allocation5 + $0x70] sm:$0xff]
    %v93 = vld [vmem:[#allocation5 + $0x78] sm:$0xff]
    %v94 = vld [vmem:[#allocation5 + $0x80] sm:$0xff]
    %v95 = vld [vmem:[#allocation5 + $0x88] sm:$0xff]
    %v96 = vld [vmem:[#allocation5 + $0x90] sm:$0xff]
    %v97 = vld [vmem:[#allocation5 + $0x98] sm:$0xff]
    %v98 = vld [vmem:[#allocation5 + $0xa0] sm:$0xff]
    %v99 = vld [vmem:[#allocation5 + $0xa8] sm:$0xff]
    %v100 = vld [vmem:[#allocation5 + $0xb0] sm:$0xff]
    %v101 = vld [vmem:[#allocation5 + $0xb8] sm:$0xff]
    %v102 = vld [vmem:[#allocation5 + $0xc0] sm:$0xff]
    %v103 = vld [vmem:[#allocation5 + $0xc8] sm:$0xff]
    %v104 = vld [vmem:[#allocation5 + $0xd0] sm:$0xff]
    %v105 = vld [vmem:[#allocation5 + $0xd8] sm:$0xff]
    %v106 = vld [vmem:[#allocation5 + $0xe0] sm:$0xff]
    %v107 = vld [vmem:[#allocation5 + $0xe8] sm:$0xff]
    %v108 = vld [vmem:[#allocation5 + $0xf0] sm:$0xff]
    %v109 = vld [vmem:[#allocation5 + $0xf8] sm:$0xff]
    %v110 = vld [vmem:[%s2] sm:$0xf]
    %v112 = vlaneseq
    %v113 = vshrl.u32 %v112, 7
    %v114 = vsub.s32 0, %v113
    %v115 = vrot.slane %v110, %v114
    %v116 = vlaneseq
    %v117 = vshrl.u32 %v116, 7
    %v118 = vsub.s32 1, %v117
    %v119 = vrot.slane %v110, %v118
    %v120 = vlaneseq
    %v121 = vshrl.u32 %v120, 7
    %v122 = vsub.s32 2, %v121
    %v123 = vrot.slane %v110, %v122
    %v124 = vlaneseq
    %v125 = vshrl.u32 %v124, 7
    %v126 = vsub.s32 3, %v125
    %v127 = vrot.slane %v110, %v126
    %v134 = vunpack.c.l.b16 %v76
    %v135 = vunpack.c.l.b16 %v77
    %v136 = vpack.c.b16 %v135, %v134
    %v170 = vunpack.c.l.b16 %v78
    %v171 = vunpack.c.h.b16 %v78
    %v172 = vunpack.c.l.b16 %v79
    %v173 = vunpack.c.h.b16 %v79
    %v174 = vunpack.c.l.b16 %v80
    %v175 = vunpack.c.h.b16 %v80
    %v176 = vunpack.c.l.b16 %v81
    %v177 = vunpack.c.h.b16 %v81
    %v178 = vunpack.c.l.b16 %v82
    %v179 = vunpack.c.h.b16 %v82
    %v180 = vunpack.c.l.b16 %v83
    %v181 = vunpack.c.h.b16 %v83
    %v182 = vunpack.c.l.b16 %v84
    %v183 = vunpack.c.h.b16 %v84
    %v184 = vunpack.c.l.b16 %v85
    %v185 = vunpack.c.h.b16 %v85
    %v186 = vunpack.c.l.b16 %v86
    %v187 = vunpack.c.h.b16 %v86
    %v188 = vunpack.c.l.b16 %v87
    %v189 = vunpack.c.h.b16 %v87
    %v190 = vunpack.c.l.b16 %v88
    %v191 = vunpack.c.h.b16 %v88
    %v192 = vunpack.c.l.b16 %v89
    %v193 = vunpack.c.h.b16 %v89
    %v194 = vunpack.c.l.b16 %v90
    %v195 = vunpack.c.h.b16 %v90
    %v196 = vunpack.c.l.b16 %v91
    %v197 = vunpack.c.h.b16 %v91
    %v198 = vunpack.c.l.b16 %v92
    %v199 = vunpack.c.h.b16 %v92
    %v200 = vunpack.c.l.b16 %v93
    %v201 = vunpack.c.h.b16 %v93
    %v202 = vunpack.c.l.b16 %v94
    %v203 = vunpack.c.h.b16 %v94
    %v204 = vunpack.c.l.b16 %v95
    %v205 = vunpack.c.h.b16 %v95
    %v206 = vunpack.c.l.b16 %v96
    %v207 = vunpack.c.h.b16 %v96
    %v208 = vunpack.c.l.b16 %v97
    %v209 = vunpack.c.h.b16 %v97
    %v210 = vunpack.c.l.b16 %v98
    %v211 = vunpack.c.h.b16 %v98
    %v212 = vunpack.c.l.b16 %v99
    %v213 = vunpack.c.h.b16 %v99
    %v214 = vunpack.c.l.b16 %v100
    %v215 = vunpack.c.h.b16 %v100
    %v216 = vunpack.c.l.b16 %v101
    %v217 = vunpack.c.h.b16 %v101
    %v218 = vunpack.c.l.b16 %v102
    %v219 = vunpack.c.h.b16 %v102
    %v220 = vunpack.c.l.b16 %v103
    %v221 = vunpack.c.h.b16 %v103
    %v222 = vunpack.c.l.b16 %v104
    %v223 = vunpack.c.h.b16 %v104
    %v224 = vunpack.c.l.b16 %v105
    %v225 = vunpack.c.h.b16 %v105
    %v226 = vunpack.c.l.b16 %v106
    %v227 = vunpack.c.h.b16 %v106
    %v228 = vunpack.c.l.b16 %v107
    %v229 = vunpack.c.h.b16 %v107
    %v230 = vunpack.c.l.b16 %v108
    %v231 = vunpack.c.h.b16 %v108
    %v232 = vunpack.c.l.b16 %v109
    %v233 = vunpack.c.h.b16 %v109
    %v234 = vpack.c.b16 %v174, %v170
    %v235 = vpack.c.b16 %v175, %v171
    %v236 = vpack.c.b16 %v176, %v172
    %v237 = vpack.c.b16 %v177, %v173
    %v238 = vpack.c.b16 %v182, %v178
    %v239 = vpack.c.b16 %v183, %v179
    %v240 = vpack.c.b16 %v184, %v180
    %v241 = vpack.c.b16 %v185, %v181
    %v242 = vpack.c.b16 %v190, %v186
    %v243 = vpack.c.b16 %v191, %v187
    %v244 = vpack.c.b16 %v192, %v188
    %v245 = vpack.c.b16 %v193, %v189
    %v246 = vpack.c.b16 %v198, %v194
    %v247 = vpack.c.b16 %v199, %v195
    %v248 = vpack.c.b16 %v200, %v196
    %v249 = vpack.c.b16 %v201, %v197
    %v250 = vpack.c.b16 %v206, %v202
    %v251 = vpack.c.b16 %v207, %v203
    %v252 = vpack.c.b16 %v208, %v204
    %v253 = vpack.c.b16 %v209, %v205
    %v254 = vpack.c.b16 %v214, %v210
    %v255 = vpack.c.b16 %v215, %v211
    %v256 = vpack.c.b16 %v216, %v212
    %v257 = vpack.c.b16 %v217, %v213
    %v258 = vpack.c.b16 %v222, %v218
    %v259 = vpack.c.b16 %v223, %v219
    %v260 = vpack.c.b16 %v224, %v220
    %v261 = vpack.c.b16 %v225, %v221
    %v262 = vpack.c.b16 %v230, %v226
    %v263 = vpack.c.b16 %v231, %v227
    %v264 = vpack.c.b16 %v232, %v228
    %v265 = vpack.c.b16 %v233, %v229
    %298 = vmatprep.subr.bf16.mxu0 %v235
    %299 = vmatpush1.bf16.msra.mxu0 %v234
    %300 = vmatprep.subr.bf16.mxu0 %v239
    %301 = vmatpush1.bf16.msra.mxu0 %v238
    %302 = vmatprep.subr.bf16.mxu0 %v243
    %303 = vmatpush1.bf16.msra.mxu0 %v242
    %304 = vmatprep.subr.bf16.mxu0 %v247
    %305 = vmatpush1.bf16.msra.mxu0 %v246
    %306 = vmatprep.subr.bf16.mxu0 %v251
    %307 = vmatpush1.bf16.msra.mxu0 %v250
    %308 = vmatprep.subr.bf16.mxu0 %v255
    %309 = vmatpush1.bf16.msra.mxu0 %v254
    %310 = vmatprep.subr.bf16.mxu0 %v259
    %311 = vmatpush1.bf16.msra.mxu0 %v258
    %312 = vmatprep.subr.bf16.mxu0 %v263
    %313 = vmatpush1.bf16.msra.mxu0 %v262
    %314 = vmatprep.subr.bf16.mxu0 0
    %315 = vmatpush1.bf16.msra.mxu0 0
    %316 = vmatprep.subr.bf16.mxu0 0
    %317 = vmatpush1.bf16.msra.mxu0 0
    %318 = vmatprep.subr.bf16.mxu0 0
    %319 = vmatpush1.bf16.msra.mxu0 0
    %320 = vmatprep.subr.bf16.mxu0 0
    %321 = vmatpush1.bf16.msra.mxu0 0
    %322 = vmatprep.subr.bf16.mxu0 0
    %323 = vmatpush1.bf16.msra.mxu0 0
    %324 = vmatprep.subr.bf16.mxu0 0
    %325 = vmatpush1.bf16.msra.mxu0 0
    %326 = vmatprep.subr.bf16.mxu0 0
    %327 = vmatpush1.bf16.msra.mxu0 0
    %328 = vmatprep.subr.bf16.mxu0 0
    %329 = vmatpush1.bf16.msra.mxu0 0
    %330 = vmatprep.mubr.bf16.mxu0 0
    %331 = vmatmul.mubr.bf16.gmra.mrb[0].mxu0 %v136
    %v332 = vpop.f32.mrb[0].mxu0
    %v333 = vadd.f32 %v115, %v332
    %v334 = vpop.f32.mrb[0].mxu0
    %v335 = vadd.f32 %v119, %v334
    %v336 = vpop.f32.mrb[0].mxu0
    %v337 = vadd.f32 %v115, %v336
    %v338 = vpop.f32.mrb[0].mxu0
    %v339 = vadd.f32 %v119, %v338
    %340 = vdwg.mxu0
    %341 = vmatprep.subr.bf16.mxu0 %v237
    %342 = vmatpush1.bf16.msra.mxu0 %v236
    %343 = vmatprep.subr.bf16.mxu0 %v241
    %344 = vmatpush1.bf16.msra.mxu0 %v240
    %345 = vmatprep.subr.bf16.mxu0 %v245
    %346 = vmatpush1.bf16.msra.mxu0 %v244
    %347 = vmatprep.subr.bf16.mxu0 %v249
    %348 = vmatpush1.bf16.msra.mxu0 %v248
    %349 = vmatprep.subr.bf16.mxu0 %v253
    %350 = vmatpush1.bf16.msra.mxu0 %v252
    %351 = vmatprep.subr.bf16.mxu0 %v257
    %352 = vmatpush1.bf16.msra.mxu0 %v256
    %353 = vmatprep.subr.bf16.mxu0 %v261
    %354 = vmatpush1.bf16.msra.mxu0 %v260
    %355 = vmatprep.subr.bf16.mxu0 %v265
    %356 = vmatpush1.bf16.msra.mxu0 %v264
    %357 = vmatprep.subr.bf16.mxu0 0
    %358 = vmatpush1.bf16.msra.mxu0 0
    %359 = vmatprep.subr.bf16.mxu0 0
    %360 = vmatpush1.bf16.msra.mxu0 0
    %361 = vmatprep.subr.bf16.mxu0 0
    %362 = vmatpush1.bf16.msra.mxu0 0
    %363 = vmatprep.subr.bf16.mxu0 0
    %364 = vmatpush1.bf16.msra.mxu0 0
    %365 = vmatprep.subr.bf16.mxu0 0
    %366 = vmatpush1.bf16.msra.mxu0 0
    %367 = vmatprep.subr.bf16.mxu0 0
    %368 = vmatpush1.bf16.msra.mxu0 0
    %369 = vmatprep.subr.bf16.mxu0 0
    %370 = vmatpush1.bf16.msra.mxu0 0
    %371 = vmatprep.subr.bf16.mxu0 0
    %372 = vmatpush1.bf16.msra.mxu0 0
    %373 = vmatprep.mubr.bf16.mxu0 0
    %374 = vmatmul.mubr.bf16.gmra.mrb[0].mxu0 %v136
    %v375 = vpop.f32.mrb[0].mxu0
    %v376 = vadd.f32 %v123, %v375
    %v377 = vpop.f32.mrb[0].mxu0
    %v378 = vadd.f32 %v127, %v377
    %v379 = vpop.f32.mrb[0].mxu0
    %v380 = vadd.f32 %v123, %v379
    %v381 = vpop.f32.mrb[0].mxu0
    %v382 = vadd.f32 %v127, %v381
    %383 = vdwg.mxu0
    %v384 = vmul.f32 %v333, %v333
    %v385 = vmul.f32 %v335, %v335
    %v386 = vmul.f32 %v376, %v376
    %v387 = vmul.f32 %v378, %v378
    %v388 = vmul.f32 %v337, %v337
    %v389 = vmul.f32 %v339, %v339
    %v390 = vmul.f32 %v380, %v380
    %v391 = vmul.f32 %v382, %v382
    %v392 = vmul.f32 %v384, %v333
    %v393 = vmul.f32 %v385, %v335
    %v394 = vmul.f32 %v386, %v376
    %v395 = vmul.f32 %v387, %v378
    %v396 = vmul.f32 %v388, %v337
    %v397 = vmul.f32 %v389, %v339
    %v398 = vmul.f32 %v390, %v380
    %v399 = vmul.f32 %v391, %v382
    %v400 = vmul.f32 %v333, 0.5
    %v401 = vmul.f32 %v335, 0.5
    %v402 = vmul.f32 %v376, 0.5
    %v403 = vmul.f32 %v378, 0.5
    %v404 = vmul.f32 %v337, 0.5
    %v405 = vmul.f32 %v339, 0.5
    %v406 = vmul.f32 %v380, 0.5
    %v407 = vmul.f32 %v382, 0.5
    %v408 = vmul.f32 %v392, 0.044715
    %v409 = vmul.f32 %v393, 0.044715
    %v410 = vmul.f32 %v394, 0.044715
    %v411 = vmul.f32 %v395, 0.044715
    %v412 = vmul.f32 %v396, 0.044715
    %v413 = vmul.f32 %v397, 0.044715
    %v414 = vmul.f32 %v398, 0.044715
    %v415 = vmul.f32 %v399, 0.044715
    %v416 = vadd.f32 %v333, %v408
    %v417 = vadd.f32 %v335, %v409
    %v418 = vadd.f32 %v376, %v410
    %v419 = vadd.f32 %v378, %v411
    %v420 = vadd.f32 %v337, %v412
    %v421 = vadd.f32 %v339, %v413
    %v422 = vadd.f32 %v380, %v414
    %v423 = vadd.f32 %v382, %v415
    %v424 = vmul.f32 %v416, 0.7978846
    %v425 = vmul.f32 %v417, 0.7978846
    %v426 = vmul.f32 %v418, 0.7978846
    %v427 = vmul.f32 %v419, 0.7978846
    %v428 = vmul.f32 %v420, 0.7978846
    %v429 = vmul.f32 %v421, 0.7978846
    %v430 = vmul.f32 %v422, 0.7978846
    %v431 = vmul.f32 %v423, 0.7978846
    %v432 = vtanh.pop %v424
    %v433 = vtanh.pop %v425
    %v434 = vtanh.pop %v426
    %v435 = vtanh.pop %v427
    %v436 = vtanh.pop %v428
    %v437 = vtanh.pop %v429
    %v438 = vtanh.pop %v430
    %v439 = vtanh.pop %v431
    %v440 = vadd.f32 %v432, 1.0
    %v441 = vadd.f32 %v433, 1.0
    %v442 = vadd.f32 %v434, 1.0
    %v443 = vadd.f32 %v435, 1.0
    %v444 = vadd.f32 %v436, 1.0
    %v445 = vadd.f32 %v437, 1.0
    %v446 = vadd.f32 %v438, 1.0
    %v447 = vadd.f32 %v439, 1.0
    %v448 = vmul.f32 %v400, %v440
    %v449 = vmul.f32 %v401, %v441
    %v450 = vmul.f32 %v402, %v442
    %v451 = vmul.f32 %v403, %v443
    %v452 = vmul.f32 %v404, %v444
    %v453 = vmul.f32 %v405, %v445
    %v454 = vmul.f32 %v406, %v446
    %v455 = vmul.f32 %v407, %v447
    %v456 = vld [vmem:[#allocation8] sm:$0xff]
    %v457 = vld [vmem:[#allocation8 + $0x8] sm:$0xff]
    %v458 = vpack.c.bf16 %v452, %v448
    %v459 = vpack.c.bf16 %v453, %v449
    %v460 = vpack.c.bf16 %v454, %v450
    %v461 = vpack.c.bf16 %v455, %v451
    %v462 = vld [vmem:[#allocation7] sm:$0xf]
    %v463 = vld [vmem:[#allocation7 + $0x4] sm:$0xf]
    %v464 = vld [vmem:[#allocation7 + $0x8] sm:$0xf]
    %v465 = vld [vmem:[#allocation7 + $0xc] sm:$0xf]
    %v466 = vld [vmem:[#allocation7 + $0x10] sm:$0xf]
    %v467 = vld [vmem:[#allocation7 + $0x14] sm:$0xf]
    %v468 = vld [vmem:[#allocation7 + $0x18] sm:$0xf]
    %v469 = vld [vmem:[#allocation7 + $0x1c] sm:$0xf]
    %v470 = vld [vmem:[#allocation7 + $0x20] sm:$0xf]
    %v471 = vld [vmem:[#allocation7 + $0x24] sm:$0xf]
    %v472 = vld [vmem:[#allocation7 + $0x28] sm:$0xf]
    %v473 = vld [vmem:[#allocation7 + $0x2c] sm:$0xf]
    %v474 = vld [vmem:[#allocation7 + $0x30] sm:$0xf]
    %v475 = vld [vmem:[#allocation7 + $0x34] sm:$0xf]
    %v476 = vld [vmem:[#allocation7 + $0x38] sm:$0xf]
    %v477 = vld [vmem:[#allocation7 + $0x3c] sm:$0xf]
    %v478 = vld [vmem:[#allocation7 + $0x40] sm:$0xf]
    %v479 = vld [vmem:[#allocation7 + $0x44] sm:$0xf]
    %v480 = vld [vmem:[#allocation7 + $0x48] sm:$0xf]
    %v481 = vld [vmem:[#allocation7 + $0x4c] sm:$0xf]
    %v482 = vld [vmem:[#allocation7 + $0x50] sm:$0xf]
    %v483 = vld [vmem:[#allocation7 + $0x54] sm:$0xf]
    %v484 = vld [vmem:[#allocation7 + $0x58] sm:$0xf]
    %v485 = vld [vmem:[#allocation7 + $0x5c] sm:$0xf]
    %v486 = vld [vmem:[#allocation7 + $0x60] sm:$0xf]
    %v487 = vld [vmem:[#allocation7 + $0x64] sm:$0xf]
    %v488 = vld [vmem:[#allocation7 + $0x68] sm:$0xf]
    %v489 = vld [vmem:[#allocation7 + $0x6c] sm:$0xf]
    %v490 = vld [vmem:[#allocation7 + $0x70] sm:$0xf]
    %v491 = vld [vmem:[#allocation7 + $0x74] sm:$0xf]
    %v492 = vld [vmem:[#allocation7 + $0x78] sm:$0xf]
    %v493 = vld [vmem:[#allocation7 + $0x7c] sm:$0xf]
    %v494 = vld [vmem:[#allocation7 + $0x80] sm:$0xf]
    %v495 = vld [vmem:[#allocation7 + $0x84] sm:$0xf]
    %v496 = vld [vmem:[#allocation7 + $0x88] sm:$0xf]
    %v497 = vld [vmem:[#allocation7 + $0x8c] sm:$0xf]
    %v498 = vld [vmem:[#allocation7 + $0x90] sm:$0xf]
    %v499 = vld [vmem:[#allocation7 + $0x94] sm:$0xf]
    %v500 = vld [vmem:[#allocation7 + $0x98] sm:$0xf]
    %v501 = vld [vmem:[#allocation7 + $0x9c] sm:$0xf]
    %v502 = vld [vmem:[#allocation7 + $0xa0] sm:$0xf]
    %v503 = vld [vmem:[#allocation7 + $0xa4] sm:$0xf]
    %v504 = vld [vmem:[#allocation7 + $0xa8] sm:$0xf]
    %v505 = vld [vmem:[#allocation7 + $0xac] sm:$0xf]
    %v506 = vld [vmem:[#allocation7 + $0xb0] sm:$0xf]
    %v507 = vld [vmem:[#allocation7 + $0xb4] sm:$0xf]
    %v508 = vld [vmem:[#allocation7 + $0xb8] sm:$0xf]
    %v509 = vld [vmem:[#allocation7 + $0xbc] sm:$0xf]
    %v510 = vld [vmem:[#allocation7 + $0xc0] sm:$0xf]
    %v511 = vld [vmem:[#allocation7 + $0xc4] sm:$0xf]
    %v512 = vld [vmem:[#allocation7 + $0xc8] sm:$0xf]
    %v513 = vld [vmem:[#allocation7 + $0xcc] sm:$0xf]
    %v514 = vld [vmem:[#allocation7 + $0xd0] sm:$0xf]
    %v515 = vld [vmem:[#allocation7 + $0xd4] sm:$0xf]
    %v516 = vld [vmem:[#allocation7 + $0xd8] sm:$0xf]
    %v517 = vld [vmem:[#allocation7 + $0xdc] sm:$0xf]
    %v518 = vld [vmem:[#allocation7 + $0xe0] sm:$0xf]
    %v519 = vld [vmem:[#allocation7 + $0xe4] sm:$0xf]
    %v520 = vld [vmem:[#allocation7 + $0xe8] sm:$0xf]
    %v521 = vld [vmem:[#allocation7 + $0xec] sm:$0xf]
    %v522 = vld [vmem:[#allocation7 + $0xf0] sm:$0xf]
    %v523 = vld [vmem:[#allocation7 + $0xf4] sm:$0xf]
    %v524 = vld [vmem:[#allocation7 + $0xf8] sm:$0xf]
    %v525 = vld [vmem:[#allocation7 + $0xfc] sm:$0xf]
    %v590 = vunpack.c.l.b16 %v462
    %v591 = vunpack.c.l.b16 %v463
    %v592 = vunpack.c.l.b16 %v464
    %v593 = vunpack.c.l.b16 %v465
    %v594 = vunpack.c.l.b16 %v466
    %v595 = vunpack.c.l.b16 %v467
    %v596 = vunpack.c.l.b16 %v468
    %v597 = vunpack.c.l.b16 %v469
    %v598 = vunpack.c.l.b16 %v470
    %v599 = vunpack.c.l.b16 %v471
    %v600 = vunpack.c.l.b16 %v472
    %v601 = vunpack.c.l.b16 %v473
    %v602 = vunpack.c.l.b16 %v474
    %v603 = vunpack.c.l.b16 %v475
    %v604 = vunpack.c.l.b16 %v476
    %v605 = vunpack.c.l.b16 %v477
    %v606 = vunpack.c.l.b16 %v478
    %v607 = vunpack.c.l.b16 %v479
    %v608 = vunpack.c.l.b16 %v480
    %v609 = vunpack.c.l.b16 %v481
    %v610 = vunpack.c.l.b16 %v482
    %v611 = vunpack.c.l.b16 %v483
    %v612 = vunpack.c.l.b16 %v484
    %v613 = vunpack.c.l.b16 %v485
    %v614 = vunpack.c.l.b16 %v486
    %v615 = vunpack.c.l.b16 %v487
    %v616 = vunpack.c.l.b16 %v488
    %v617 = vunpack.c.l.b16 %v489
    %v618 = vunpack.c.l.b16 %v490
    %v619 = vunpack.c.l.b16 %v491
    %v620 = vunpack.c.l.b16 %v492
    %v621 = vunpack.c.l.b16 %v493
    %v622 = vunpack.c.l.b16 %v494
    %v623 = vunpack.c.l.b16 %v495
    %v624 = vunpack.c.l.b16 %v496
    %v625 = vunpack.c.l.b16 %v497
    %v626 = vunpack.c.l.b16 %v498
    %v627 = vunpack.c.l.b16 %v499
    %v628 = vunpack.c.l.b16 %v500
    %v629 = vunpack.c.l.b16 %v501
    %v630 = vunpack.c.l.b16 %v502
    %v631 = vunpack.c.l.b16 %v503
    %v632 = vunpack.c.l.b16 %v504
    %v633 = vunpack.c.l.b16 %v505
    %v634 = vunpack.c.l.b16 %v506
    %v635 = vunpack.c.l.b16 %v507
    %v636 = vunpack.c.l.b16 %v508
    %v637 = vunpack.c.l.b16 %v509
    %v638 = vunpack.c.l.b16 %v510
    %v639 = vunpack.c.l.b16 %v511
    %v640 = vunpack.c.l.b16 %v512
    %v641 = vunpack.c.l.b16 %v513
    %v642 = vunpack.c.l.b16 %v514
    %v643 = vunpack.c.l.b16 %v515
    %v644 = vunpack.c.l.b16 %v516
    %v645 = vunpack.c.l.b16 %v517
    %v646 = vunpack.c.l.b16 %v518
    %v647 = vunpack.c.l.b16 %v519
    %v648 = vunpack.c.l.b16 %v520
    %v649 = vunpack.c.l.b16 %v521
    %v650 = vunpack.c.l.b16 %v522
    %v651 = vunpack.c.l.b16 %v523
    %v652 = vunpack.c.l.b16 %v524
    %v653 = vunpack.c.l.b16 %v525
    %v654 = vpack.c.b16 %v591, %v590
    %v655 = vpack.c.b16 %v593, %v592
    %v656 = vpack.c.b16 %v595, %v594
    %v657 = vpack.c.b16 %v597, %v596
    %v658 = vpack.c.b16 %v599, %v598
    %v659 = vpack.c.b16 %v601, %v600
    %v660 = vpack.c.b16 %v603, %v602
    %v661 = vpack.c.b16 %v605, %v604
    %v662 = vpack.c.b16 %v607, %v606
    %v663 = vpack.c.b16 %v609, %v608
    %v664 = vpack.c.b16 %v611, %v610
    %v665 = vpack.c.b16 %v613, %v612
    %v666 = vpack.c.b16 %v615, %v614
    %v667 = vpack.c.b16 %v617, %v616
    %v668 = vpack.c.b16 %v619, %v618
    %v669 = vpack.c.b16 %v621, %v620
    %v670 = vpack.c.b16 %v623, %v622
    %v671 = vpack.c.b16 %v625, %v624
    %v672 = vpack.c.b16 %v627, %v626
    %v673 = vpack.c.b16 %v629, %v628
    %v674 = vpack.c.b16 %v631, %v630
    %v675 = vpack.c.b16 %v633, %v632
    %v676 = vpack.c.b16 %v635, %v634
    %v677 = vpack.c.b16 %v637, %v636
    %v678 = vpack.c.b16 %v639, %v638
    %v679 = vpack.c.b16 %v641, %v640
    %v680 = vpack.c.b16 %v643, %v642
    %v681 = vpack.c.b16 %v645, %v644
    %v682 = vpack.c.b16 %v647, %v646
    %v683 = vpack.c.b16 %v649, %v648
    %v684 = vpack.c.b16 %v651, %v650
    %v685 = vpack.c.b16 %v653, %v652
    %718 = vmatprep.subr.bf16.mxu0 0
    %719 = vmatpush1.bf16.msra.mxu0 %v654
    %720 = vmatprep.subr.bf16.mxu0 0
    %721 = vmatpush1.bf16.msra.mxu0 %v655
    %722 = vmatprep.subr.bf16.mxu0 0
    %723 = vmatpush1.bf16.msra.mxu0 %v656
    %724 = vmatprep.subr.bf16.mxu0 0
    %725 = vmatpush1.bf16.msra.mxu0 %v657
    %726 = vmatprep.subr.bf16.mxu0 0
    %727 = vmatpush1.bf16.msra.mxu0 %v658
    %728 = vmatprep.subr.bf16.mxu0 0
    %729 = vmatpush1.bf16.msra.mxu0 %v659
    %730 = vmatprep.subr.bf16.mxu0 0
    %731 = vmatpush1.bf16.msra.mxu0 %v660
    %732 = vmatprep.subr.bf16.mxu0 0
    %733 = vmatpush1.bf16.msra.mxu0 %v661
    %734 = vmatprep.subr.bf16.mxu0 0
    %735 = vmatpush1.bf16.msra.mxu0 %v662
    %736 = vmatprep.subr.bf16.mxu0 0
    %737 = vmatpush1.bf16.msra.mxu0 %v663
    %738 = vmatprep.subr.bf16.mxu0 0
    %739 = vmatpush1.bf16.msra.mxu0 %v664
    %740 = vmatprep.subr.bf16.mxu0 0
    %741 = vmatpush1.bf16.msra.mxu0 %v665
    %742 = vmatprep.subr.bf16.mxu0 0
    %743 = vmatpush1.bf16.msra.mxu0 %v666
    %744 = vmatprep.subr.bf16.mxu0 0
    %745 = vmatpush1.bf16.msra.mxu0 %v667
    %746 = vmatprep.subr.bf16.mxu0 0
    %747 = vmatpush1.bf16.msra.mxu0 %v668
    %748 = vmatprep.subr.bf16.mxu0 0
    %749 = vmatpush1.bf16.msra.mxu0 %v669
    %750 = vmatprep.mubr.bf16.mxu0 %v459
    %751 = vmatmul.mubr.bf16.gmra.mrb[0].mxu0 %v458
    %v752 = vpop.f32.mrb[0].mxu0
    %v753 = vadd.f32 0.0, %v752
    %v754 = vpop.f32.mrb[0].mxu0
    %v755 = vpop.f32.mrb[0].mxu0
    %v756 = vadd.f32 0.0, %v755
    %v757 = vpop.f32.mrb[0].mxu0
    %758 = vdwg.mxu0
    %759 = vmatprep.subr.bf16.mxu0 0
    %760 = vmatpush1.bf16.msra.mxu0 %v670
    %761 = vmatprep.subr.bf16.mxu0 0
    %762 = vmatpush1.bf16.msra.mxu0 %v671
    %763 = vmatprep.subr.bf16.mxu0 0
    %764 = vmatpush1.bf16.msra.mxu0 %v672
    %765 = vmatprep.subr.bf16.mxu0 0
    %766 = vmatpush1.bf16.msra.mxu0 %v673
    %767 = vmatprep.subr.bf16.mxu0 0
    %768 = vmatpush1.bf16.msra.mxu0 %v674
    %769 = vmatprep.subr.bf16.mxu0 0
    %770 = vmatpush1.bf16.msra.mxu0 %v675
    %771 = vmatprep.subr.bf16.mxu0 0
    %772 = vmatpush1.bf16.msra.mxu0 %v676
    %773 = vmatprep.subr.bf16.mxu0 0
    %774 = vmatpush1.bf16.msra.mxu0 %v677
    %775 = vmatprep.subr.bf16.mxu0 0
    %776 = vmatpush1.bf16.msra.mxu0 %v678
    %777 = vmatprep.subr.bf16.mxu0 0
    %778 = vmatpush1.bf16.msra.mxu0 %v679
    %779 = vmatprep.subr.bf16.mxu0 0
    %780 = vmatpush1.bf16.msra.mxu0 %v680
    %781 = vmatprep.subr.bf16.mxu0 0
    %782 = vmatpush1.bf16.msra.mxu0 %v681
    %783 = vmatprep.subr.bf16.mxu0 0
    %784 = vmatpush1.bf16.msra.mxu0 %v682
    %785 = vmatprep.subr.bf16.mxu0 0
    %786 = vmatpush1.bf16.msra.mxu0 %v683
    %787 = vmatprep.subr.bf16.mxu0 0
    %788 = vmatpush1.bf16.msra.mxu0 %v684
    %789 = vmatprep.subr.bf16.mxu0 0
    %790 = vmatpush1.bf16.msra.mxu0 %v685
    %791 = vmatprep.mubr.bf16.mxu0 %v461
    %792 = vmatmul.mubr.bf16.gmra.mrb[0].mxu0 %v460
    %v793 = vpop.f32.mrb[0].mxu0
    %v794 = vadd.f32 %v753, %v793
    %v795 = vpop.f32.mrb[0].mxu0
    %v796 = vpop.f32.mrb[0].mxu0
    %v797 = vadd.f32 %v756, %v796
    %v798 = vpop.f32.mrb[0].mxu0
    %799 = vdwg.mxu0
    %v800 = vadd.f32 %v456, %v794
    %v801 = vadd.f32 %v457, %v797
    %802 = vst [vmem:[#allocation8] sm:$0xff] %v800
    %803 = vst [vmem:[#allocation8 + $0x8] sm:$0xff] %v801
    // Predicated region
    $region38: #{tpu_custom_call.1} parent=1 // pred_check
      _
    $region39: #{tpu_custom_call.1} parent=1 // pred_check_branch
      %805 = sbr.rel (0) target = $region41
    $region40: #{tpu_custom_call.1} parent=1 // pred_region
      %s807 = ssub.s32 256, 256
      %808 = vsyncadd [#allocation4], %s807
      %s809 = sshll.u32 [#allocation8], 4
      %s810 = int_to_ptr.vmem [resolvable:$true] %s809
      %815 = dma.vmem_to_hbm [thread:$0]  %s810, 256, %s5, [#allocation4], 128, 128, 8
    $region41: #{tpu_custom_call.1} parent=1 // pred_fallthru
      _
    // Predicated region
    $region42: #{tpu_custom_call.1} parent=1 // pred_check
      _
    $region43: #{tpu_custom_call.1} parent=1 // pred_check_branch
      %817 = sbr.rel (0) target = $region45
    $region44: #{tpu_custom_call.1} parent=1 // pred_region
      %818 = dma.done [#allocation4], 256
    $region45: #{tpu_custom_call.1} parent=1 // pred_fallthru
      _
    %819 = vsyncpa [#allocation3], 1
    %820 = vsyncpa [#allocation6], 1
    %821 = vsyncpa [#allocation4], 1

</llo_original>
